<compile_context>
chip_gen: v6e
topology: v6e:2x2x1
jax: 0.10.0
libtpu: 0.0.40
codegen_flags: <defaults>
</compile_context>

<pallas_src>
import functools

import jax
import jax.numpy as jnp
from jax.experimental import pallas as pl
from jax.experimental.pallas import tpu as pltpu


def _splitting_kernel(x_ref, even_ref, odd_ref, *, d):
    # x_ref block: (TILE_ROWS, 2*D).  Row r holds [even_row_r | odd_row_r]
    # along the lane axis, so the split is two contiguous static lane slices.
    x = x_ref[...]
    even_ref[...] = x[:, :d]
    odd_ref[...] = x[:, d:]


def _target_block_bytes():
    """Generation-aware DMA input-block target (pure HBM-roofline kernel)."""
    try:
        kind = jax.devices()[0].device_kind.lower()
    except Exception:  # pragma: no cover - defensive
        kind = ""
    if "v7" in kind:
        # Cap at 4 MiB: double-buffered footprint ~= 4x input block = 16 MiB,
        # well inside v7x's 32 MiB scoped-VMEM default (64 MiB physical), so
        # no vmem_limit_bytes override is needed.
        return 4 << 20
    if "v6" in kind:
        return 4 << 20
    if "v5" in kind:
        # 2 MiB already puts v5e at ~95% of its (slower) HBM roofline and its
        # 8 MiB footprint stays under the 16 MiB scoped-VMEM default.
        return 2 << 20
    return 2 << 20


def _pick_tile_rows(total_rows, packed_row_bytes, itemsize, target_bytes):
    """Pick a row-tile size giving ~target_bytes input blocks."""
    tile = target_bytes // max(packed_row_bytes, 1)
    if tile >= total_rows:
        return total_rows                      # full extent -> always legal
    # dtype-aware sublane alignment: 8 rows (f32), 16 (bf16/f16), 32 (i8/fp8)
    sub = max(32 // max(itemsize, 1), 8)
    tile = max((tile // sub) * sub, sub)
    return min(tile, total_rows)


def splitting(x, *, tile_rows=None):
    """Pallas equivalent of Splitting.forward: (x[:, ::2, :], x[:, 1::2, :])."""
    B, T, D = x.shape
    assert T % 2 == 0, "sequence length must be even for this kernel"
    half = T // 2
    rows = B * half
    itemsize = jnp.dtype(x.dtype).itemsize

    # Free, contiguous reshape in HBM: adjacent (even, odd) rows become the
    # left/right halves of one lane-dense row of width 2*D; batch is folded
    # into the row axis so block size is not capped by per-batch `half`.
    x_packed = x.reshape(rows, 2 * D)

    if tile_rows is None:
        tile_rows = _pick_tile_rows(rows, 2 * D * itemsize, itemsize,
                                    _target_block_bytes())

    grid = (pl.cdiv(rows, tile_rows),)
    kernel = functools.partial(_splitting_kernel, d=D)
    out_shape = (
        jax.ShapeDtypeStruct((rows, D), x.dtype),
        jax.ShapeDtypeStruct((rows, D), x.dtype),
    )
    even, odd = pl.pallas_call(
        kernel,
        out_shape=out_shape,
        grid=grid,
        in_specs=[
            pl.BlockSpec((tile_rows, 2 * D), lambda i: (i, 0)),
        ],
        out_specs=(
            pl.BlockSpec((tile_rows, D), lambda i: (i, 0)),
            pl.BlockSpec((tile_rows, D), lambda i: (i, 0)),
        ),
        compiler_params=pltpu.CompilerParams(
            dimension_semantics=("parallel",),
        ),
        cost_estimate=pl.CostEstimate(
            flops=0,
            transcendentals=0,
            bytes_accessed=2 * B * T * D * itemsize,  # read + write, zero FLOPs
        ),
    )(x_packed)

    # Free reshapes back to the module's (B, T//2, D) output layout.
    return even.reshape(B, half, D), odd.reshape(B, half, D)


if __name__ == "__main__":
    key = jax.random.PRNGKey(0)

    # Small shape consistent with the module's (batch, seq, feature) input.
    B, T, D = 2, 8, 32
    x = jax.random.normal(key, (B, T, D), dtype=jnp.float32)

    even, odd = splitting(x)
    even = jax.block_until_ready(even)
    odd = jax.block_until_ready(odd)

    ref_even = x[:, ::2, :]
    ref_odd = x[:, 1::2, :]
    assert even.shape == ref_even.shape and odd.shape == ref_odd.shape
    assert jnp.array_equal(even, ref_even)
    assert jnp.array_equal(odd, ref_odd)

    # Lane-dense D (multiple of 128) + multi-step grid over the flattened
    # (batch * half) row axis to exercise the pipelined / parallel path.
    B2, T2, D2 = 2, 80, 128
    x2 = jax.random.normal(jax.random.PRNGKey(1), (B2, T2, D2), dtype=jnp.float32)
    even2, odd2 = splitting(x2, tile_rows=16)   # 80 rows -> 5 grid steps
    even2 = jax.block_until_ready(even2)
    odd2 = jax.block_until_ready(odd2)
    assert jnp.array_equal(even2, x2[:, ::2, :])
    assert jnp.array_equal(odd2, x2[:, 1::2, :])

    # bf16 case exercising the dtype-aware auto tile-size path.
    B3, T3, D3 = 2, 16, 128
    x3 = jax.random.normal(jax.random.PRNGKey(2), (B3, T3, D3)).astype(jnp.bfloat16)
    even3, odd3 = splitting(x3)
    even3 = jax.block_until_ready(even3)
    odd3 = jax.block_until_ready(odd3)
    assert jnp.array_equal(even3, x3[:, ::2, :])
    assert jnp.array_equal(odd3, x3[:, 1::2, :])

    print("KERNEL_OK")
</pallas_src>

<mosaic_0001>
module attributes {stable_mosaic.version = 11 : i64} {
  func.func @_splitting_kernel(%arg0: i32, %arg1: memref<8x64xf32, #tpu.memory_space<vmem>>, %arg2: memref<8x32xf32, #tpu.memory_space<vmem>>, %arg3: memref<8x32xf32, #tpu.memory_space<vmem>>) attributes {dimension_semantics = [#tpu.dimension_semantics<parallel>], iteration_bounds = array<i64: 1>, scalar_prefetch = 0 : i64, scratch_operands = 0 : i64, tpu.core_type = #tpu.core_type<tc>, window_params = [{transform_indices = @transform_0, window_bounds = array<i64: 8, 64>}, {transform_indices = @transform_1, window_bounds = array<i64: 8, 32>}, {transform_indices = @transform_2, window_bounds = array<i64: 8, 32>}]} {
    %c0 = arith.constant 0 : index
    %c0_0 = arith.constant 0 : index
    %0 = vector.load %arg1[%c0, %c0_0] : memref<8x64xf32, #tpu.memory_space<vmem>>, vector<8x64xf32>
    %1 = vector.extract_strided_slice %0 {offsets = [0, 0], sizes = [8, 32], strides = [1, 1]} : vector<8x64xf32> to vector<8x32xf32>
    %c0_1 = arith.constant 0 : index
    %c0_2 = arith.constant 0 : index
    %2 = vector.load %arg2[%c0_1, %c0_2] : memref<8x32xf32, #tpu.memory_space<vmem>>, vector<8x32xf32>
    tpu.vector_store %arg2[%c0_1, %c0_2], %1 {strides = array<i32>} : memref<8x32xf32, #tpu.memory_space<vmem>>, vector<8x32xf32>,
    %3 = vector.extract_strided_slice %0 {offsets = [0, 32], sizes = [8, 32], strides = [1, 1]} : vector<8x64xf32> to vector<8x32xf32>
    %c0_3 = arith.constant 0 : index
    %c0_4 = arith.constant 0 : index
    %4 = vector.load %arg3[%c0_3, %c0_4] : memref<8x32xf32, #tpu.memory_space<vmem>>, vector<8x32xf32>
    tpu.vector_store %arg3[%c0_3, %c0_4], %3 {strides = array<i32>} : memref<8x32xf32, #tpu.memory_space<vmem>>, vector<8x32xf32>,
    return
  }
  func.func @transform_0(%arg0: i32) -> (i32, i32) {
    %c0_i32 = arith.constant 0 : i32
    %c0_i32_0 = arith.constant 0 : i32
    return %arg0, %c0_i32 : i32, i32
  }
  func.func @transform_1(%arg0: i32) -> (i32, i32) {
    %c0_i32 = arith.constant 0 : i32
    %c0_i32_0 = arith.constant 0 : i32
    return %arg0, %c0_i32 : i32, i32
  }
  func.func @transform_2(%arg0: i32) -> (i32, i32) {
    %c0_i32 = arith.constant 0 : i32
    %c0_i32_0 = arith.constant 0 : i32
    return %arg0, %c0_i32 : i32, i32
  }
}

</mosaic_0001>

<llo_original>
// kernel: tpu_custom_call.1
$region0: #{tpu_custom_call.1}
  #allocation0 [shape = 'u32[]', space=smem, size = 0x4, offset = 0x4, fixed_abs, tag = 'smem constant byte address 0x4 - core index']
  #allocation1 [shape = 'u32[144,128]{1,0:T(1,128)}', space=vmem, size = 0x12000, scoped, tag = 'internal scratch']
  %s0 = inlined_call_operand.hbm [shape: f32[8,64], index: 0, kind: input, shape index: {}]
  %s1 = inlined_call_operand.hbm [shape: f32[8,32], index: 1, kind: output, shape index: {0}]
  %s2 = inlined_call_operand.hbm [shape: f32[8,32], index: 2, kind: output, shape index: {1}]
  %3 = xla_tuple %s1, %s2
  %s4 = sld [smem:[#allocation0]]
  $region26: #{tpu_custom_call.1} parent=0
    _
  %s6 = ssub.s32 1, %s4
  %s7 = scalar_select 0, %s6, %s4
  $region1: #{tpu_custom_call.1} parent=0
    #allocation2 [shape = 'u8[4096]{0}', space=vmem, size = 0x1000, scoped, tag = 'input window, operand 0, single buffered']
    #allocation3 [shape = 's32[1]{0}', space=sflag, size = 0x4, scoped, tag = 'scoped memory for tpu_custom_call.1']
    #allocation4 [shape = 's32[1]{0}', space=sflag, size = 0x4, scoped, tag = 'scoped memory for tpu_custom_call.1']
    #allocation5 [shape = 'u8[4096]{0}', space=vmem, size = 0x1000, scoped, tag = 'output window, operand 0, single buffered']
    #allocation6 [shape = 'u8[4096]{0}', space=vmem, size = 0x1000, scoped, tag = 'output window, operand 1, single buffered']
    #allocation7 [shape = 's32[1]{0}', space=sflag, size = 0x4, scoped, tag = 'scoped memory for tpu_custom_call.1']
    %8 = vsyncpa [#allocation3], 0
    %9 = vsyncpa [#allocation4], 0
    %10 = vsyncpa [#allocation7], 0
    // Predicated region
    $region2: #{tpu_custom_call.1} parent=1 // pred_check
      _
    $region3: #{tpu_custom_call.1} parent=1 // pred_check_branch
      %12 = sbr.rel (0) target = $region5
    $region4: #{tpu_custom_call.1} parent=1 // pred_region
      %s14 = ssub.s32 128, 128
      %15 = vsyncadd [#allocation3], %s14
      %s17 = sshll.u32 [#allocation2], 4
      %s18 = int_to_ptr.vmem [resolvable:$true] %s17
      %20 = dma.hbm_to_vmem [thread:$0]  %s0, 128, %s18, [#allocation3]
    $region5: #{tpu_custom_call.1} parent=1 // pred_fallthru
      _
    // Predicated region
    $region6: #{tpu_custom_call.1} parent=1 // pred_check
      _
    $region7: #{tpu_custom_call.1} parent=1 // pred_check_branch
      %22 = sbr.rel (0) target = $region9
    $region8: #{tpu_custom_call.1} parent=1 // pred_region
      %23 = dma.done [#allocation3], 128
    $region9: #{tpu_custom_call.1} parent=1 // pred_fallthru
      _
    %v24 = vld [vmem:[#allocation2] sm:$0xff]
    %vm25 = vcmask 261120
    %26 = vst.msk [vmem:[#allocation5] sm:$0xff] %vm25, %v24
    %28 = vrot.lane.b32.xlu0 %v24, 96
    %v29 = vpop.permute.xlu0 %28
    %31 = vst.msk [vmem:[#allocation6] sm:$0xff] %vm25, %v29
    // Predicated region
    $region10: #{tpu_custom_call.1} parent=1 // pred_check
      _
    $region11: #{tpu_custom_call.1} parent=1 // pred_check_branch
      %33 = sbr.rel (0) target = $region13
    $region12: #{tpu_custom_call.1} parent=1 // pred_region
      %s35 = ssub.s32 128, 128
      %36 = vsyncadd [#allocation4], %s35
      %s38 = sshll.u32 [#allocation5], 4
      %s39 = int_to_ptr.vmem [resolvable:$true] %s38
      %41 = dma.vmem_to_hbm [thread:$0]  %s39, 128, %s1, [#allocation4]
    $region13: #{tpu_custom_call.1} parent=1 // pred_fallthru
      _
    // Predicated region
    $region14: #{tpu_custom_call.1} parent=1 // pred_check
      _
    $region15: #{tpu_custom_call.1} parent=1 // pred_check_branch
      %43 = sbr.rel (0) target = $region17
    $region16: #{tpu_custom_call.1} parent=1 // pred_region
      %s45 = ssub.s32 128, 128
      %46 = vsyncadd [#allocation7], %s45
      %s48 = sshll.u32 [#allocation6], 4
      %s49 = int_to_ptr.vmem [resolvable:$true] %s48
      %51 = dma.vmem_to_hbm [thread:$0]  %s49, 128, %s2, [#allocation7]
    $region17: #{tpu_custom_call.1} parent=1 // pred_fallthru
      _
    // Predicated region
    $region18: #{tpu_custom_call.1} parent=1 // pred_check
      _
    $region19: #{tpu_custom_call.1} parent=1 // pred_check_branch
      %53 = sbr.rel (0) target = $region21
    $region20: #{tpu_custom_call.1} parent=1 // pred_region
      %54 = dma.done [#allocation4], 128
    $region21: #{tpu_custom_call.1} parent=1 // pred_fallthru
      _
    // Predicated region
    $region22: #{tpu_custom_call.1} parent=1 // pred_check
      _
    $region23: #{tpu_custom_call.1} parent=1 // pred_check_branch
      %56 = sbr.rel (0) target = $region25
    $region24: #{tpu_custom_call.1} parent=1 // pred_region
      %57 = dma.done [#allocation7], 128
    $region25: #{tpu_custom_call.1} parent=1 // pred_fallthru
      _
    %58 = vsyncpa [#allocation3], 1
    %59 = vsyncpa [#allocation4], 1
    %60 = vsyncpa [#allocation7], 1

</llo_original>
